<compile_context>
chip_gen: v5e
topology: v5e:2x2
jax: 0.10.0
libtpu: 0.0.40
codegen_flags: <defaults>
</compile_context>

<pallas_src>
import functools

import jax
import jax.numpy as jnp
from jax import lax
from jax.experimental import pallas as pl
from jax.experimental.pallas import tpu as pltpu


def _round_up(v, m):
    return (v + m - 1) // m * m


def _clamp_tile(target, n):
    """Clamp a (power-of-two x 128) tile target to the smallest power-of-two
    multiple of 128 covering n, so small problems don't over-pad while tile
    size stays independent of awkward N."""
    cap = max(128, pl.next_power_of_2(_round_up(n, 128)))
    return min(target, cap)


# ---------------------------------------------------------------------------
# Stage 1: H = A_norm @ XW + b   — grid (i over H rows, k over reduction)
# ---------------------------------------------------------------------------
def _gcn_layer_kernel_f32(a_ref, xw_ref, b_ref, h_ref):
    # H is f32: the output block is resident across k -> accumulate in place.
    k = pl.program_id(1)

    @pl.when(k == 0)
    def _():
        h_ref[...] = jnp.broadcast_to(b_ref[...], h_ref.shape)

    h_ref[...] += jnp.dot(a_ref[...], xw_ref[...],
                          preferred_element_type=jnp.float32)


def _gcn_layer_kernel_acc(a_ref, xw_ref, b_ref, h_ref, acc_ref):
    # Narrow H dtype (e.g. bf16): keep an f32 VMEM accumulator.
    k = pl.program_id(1)

    @pl.when(k == 0)
    def _():
        acc_ref[...] = jnp.broadcast_to(b_ref[...], acc_ref.shape)

    acc_ref[...] += jnp.dot(a_ref[...], xw_ref[...],
                            preferred_element_type=jnp.float32)

    @pl.when(k == pl.num_programs(1) - 1)
    def _():
        h_ref[...] = acc_ref[...].astype(h_ref.dtype)


# ---------------------------------------------------------------------------
# Stage 2: S = H @ H^T   — grid (i, j) over lane-dense output tiles.
# Second operand is a pre-transposed (dp, N) slab, so the contraction is
# minor(lhs) x major(rhs): no per-tile transpose/relayout on the XLU.
# ---------------------------------------------------------------------------
def _dot_decoder_kernel(hi_ref, ht_ref, s_ref, *, sigmoid_s):
    s = jnp.dot(hi_ref[...], ht_ref[...], preferred_element_type=jnp.float32)
    if sigmoid_s:
        s = jax.nn.sigmoid(s)  # EUP op on the f32 accumulator, fused per tile
    s_ref[...] = s.astype(s_ref.dtype)


def _gcn_dense_norm_adj(edge_index, num_nodes, dtype=jnp.float32):
    """Dense symmetric-normalized adjacency with (remaining) self loops.

    Duplicate edges are summed (scatter-add), matching PyG GCNConv message
    accumulation; self loops are only added for nodes that lack one.
    """
    src = edge_index[0]
    dst = edge_index[1]
    a = jnp.zeros((num_nodes, num_nodes), dtype).at[dst, src].add(1.0)
    idx = jnp.arange(num_nodes)
    diag = a[idx, idx]
    a = a.at[idx, idx].set(jnp.where(diag > 0, diag, jnp.ones_like(diag)))
    deg = jnp.sum(a, axis=1)
    dinv = jnp.where(deg > 0, 1.0 / jnp.sqrt(deg), 0.0)
    return dinv[:, None] * a * dinv[None, :]


def dot_product_decoder(x, edge_index, weight, bias, *, sigmoid_s=False,
                        tm1=512, tk=1024, tm2=1024, tn2=512,
                        compute_dtype=jnp.float32, out_dtype=None):
    """Pallas implementation of DotProductDecoder.forward.

    compute_dtype controls the dtype streamed through HBM for A, XW, H and
    (by default) S; MXU accumulation is always f32. Flip to bf16 to roughly
    halve the dominant HBM traffic in both stages.
    """
    n, f = x.shape
    d = weight.shape[1]
    out_dtype = compute_dtype if out_dtype is None else out_dtype

    a_norm = _gcn_dense_norm_adj(edge_index, n, jnp.float32)

    # Tiles are powers of two x 128, independent of N; N is padded up to a
    # multiple of the largest tile (grid extents are exact divisions).
    tm1 = _clamp_tile(tm1, n)
    tk = _clamp_tile(tk, n)
    tm2 = _clamp_tile(tm2, n)
    tn2 = _clamp_tile(tn2, n)
    npad = _round_up(n, max(tm1, tk, tm2, tn2))
    fp = _round_up(f, 128)
    dp = _round_up(d, 128)

    a_pad = jnp.pad(a_norm, ((0, npad - n), (0, npad - n))).astype(compute_dtype)
    x_pad = jnp.pad(x, ((0, npad - n), (0, fp - f))).astype(jnp.float32)
    w_pad = jnp.pad(weight, ((0, fp - f), (0, dp - d))).astype(jnp.float32)
    b_pad = jnp.pad(bias.reshape(1, d), ((0, 0), (0, dp - d))).astype(jnp.float32)

    # XW hoisted out of the stage-1 grid: one tiny (npad,fp)x(fp,dp) matmul
    # (HIGHEST precision so the f32 path stays bit-comparable to a reference).
    xw = jnp.dot(x_pad, w_pad, precision=lax.Precision.HIGHEST,
                 preferred_element_type=jnp.float32).astype(compute_dtype)

    vmem_cap = 48 * 1024 * 1024  # > 16/32 MiB scoped defaults, < v7x 64 MiB

    # -------- Stage 1: GCN layer, f32 accumulate, pipelined row/k tiles ------
    if compute_dtype == jnp.float32:
        kernel1, scratch1 = _gcn_layer_kernel_f32, []
    else:
        kernel1 = _gcn_layer_kernel_acc
        scratch1 = [pltpu.VMEM((tm1, dp), jnp.float32)]

    h = pl.pallas_call(
        kernel1,
        out_shape=jax.ShapeDtypeStruct((npad, dp), compute_dtype),
        grid_spec=pltpu.PrefetchScalarGridSpec(
            num_scalar_prefetch=0,
            grid=(npad // tm1, npad // tk),
            in_specs=[
                pl.BlockSpec((tm1, tk), lambda i, k: (i, k)),   # A_norm row tile
                pl.BlockSpec((tk, dp), lambda i, k: (k, 0)),    # XW k tile
                pl.BlockSpec((1, dp), lambda i, k: (0, 0)),     # bias (resident)
            ],
            out_specs=pl.BlockSpec((tm1, dp), lambda i, k: (i, 0)),
            scratch_shapes=scratch1,
        ),
        compiler_params=pltpu.CompilerParams(
            dimension_semantics=("parallel", "arbitrary"),
            vmem_limit_bytes=vmem_cap),
    )(a_pad, xw, b_pad)

    # One O(N*dp) transpose between stages so stage 2 needs no per-tile
    # relayout of the second operand.
    ht = jnp.transpose(h)

    # -------- Stage 2: S = H @ H^T, lane-dense (tm2, tn2) output tiles -------
    s = pl.pallas_call(
        functools.partial(_dot_decoder_kernel, sigmoid_s=sigmoid_s),
        out_shape=jax.ShapeDtypeStruct((npad, npad), out_dtype),
        grid_spec=pltpu.PrefetchScalarGridSpec(
            num_scalar_prefetch=0,
            grid=(npad // tm2, npad // tn2),
            in_specs=[
                pl.BlockSpec((tm2, dp), lambda i, j: (i, 0)),   # H row tile
                pl.BlockSpec((dp, tn2), lambda i, j: (0, j)),   # H^T col tile
            ],
            out_specs=pl.BlockSpec((tm2, tn2), lambda i, j: (i, j)),
        ),
        compiler_params=pltpu.CompilerParams(
            dimension_semantics=("parallel", "parallel"),
            vmem_limit_bytes=vmem_cap),
    )(h, ht)

    return s[:n, :n]


def _reference(x, edge_index, weight, bias, *, sigmoid_s=False):
    a_norm = _gcn_dense_norm_adj(edge_index, x.shape[0], jnp.float32)
    xw = jnp.dot(x, weight, precision=lax.Precision.HIGHEST)
    h = jnp.dot(a_norm, xw, precision=lax.Precision.HIGHEST) + bias[None, :]
    s = jnp.dot(h, h.T, precision=lax.Precision.HIGHEST)
    return jax.nn.sigmoid(s) if sigmoid_s else s


if __name__ == "__main__":
    key = jax.random.PRNGKey(0)
    k_x, k_e, k_w, k_b = jax.random.split(key, 4)

    N, IN_DIM, HID_DIM = 300, 16, 32
    NUM_EDGES = 900

    x = jax.random.normal(k_x, (N, IN_DIM), dtype=jnp.float32)
    edge_index = jax.random.randint(k_e, (2, NUM_EDGES), 0, N, dtype=jnp.int32)

    # Deterministic GCNConv parameters (glorot-ish scale) — synthetic weights.
    glorot = (6.0 / (IN_DIM + HID_DIM)) ** 0.5
    weight = jax.random.uniform(
        k_w, (IN_DIM, HID_DIM), dtype=jnp.float32, minval=-glorot, maxval=glorot
    )
    bias = jax.random.normal(k_b, (HID_DIM,), dtype=jnp.float32) * 0.01

    ref = _reference(x, edge_index, weight, bias, sigmoid_s=False)
    ref_sig = _reference(x, edge_index, weight, bias, sigmoid_s=True)

    # 1) Multi-tile path: tiles forced to 128 -> 3x3 grids in both stages
    #    (exercises k-accumulation and tile edges), f32 end-to-end.
    out_small = jax.block_until_ready(dot_product_decoder(
        x, edge_index, weight, bias, sigmoid_s=False,
        tm1=128, tk=128, tm2=128, tn2=128))
    assert out_small.shape == (N, N)
    assert jnp.allclose(out_small, ref, atol=1e-4, rtol=1e-4), \
        "multi-tile f32 mismatch vs reference"

    # 2) Default (large) tiles, f32.
    out_def = jax.block_until_ready(
        dot_product_decoder(x, edge_index, weight, bias, sigmoid_s=False))
    assert jnp.allclose(out_def, ref, atol=1e-4, rtol=1e-4), \
        "default-tile f32 mismatch vs reference"

    # 3) Fused per-tile sigmoid path.
    out_sig = jax.block_until_ready(
        dot_product_decoder(x, edge_index, weight, bias, sigmoid_s=True))
    assert jnp.allclose(out_sig, ref_sig, atol=1e-4, rtol=1e-4), \
        "sigmoid mismatch vs reference"

    # 4) bf16 streaming path (A/XW/H/S in bf16, f32 MXU accumulation):
    #    exercises the scratch-accumulator kernel; loose relative check.
    out_bf16 = jax.block_until_ready(dot_product_decoder(
        x, edge_index, weight, bias, sigmoid_s=False,
        compute_dtype=jnp.bfloat16))
    rel = (jnp.max(jnp.abs(out_bf16.astype(jnp.float32) - ref))
           / (jnp.max(jnp.abs(ref)) + 1e-6))
    assert rel < 5e-2, f"bf16 path relative error too large: {rel}"

    print("KERNEL_OK")
</pallas_src>

<mosaic_0001>
module attributes {stable_mosaic.version = 11 : i64} {
  func.func @_gcn_layer_kernel_f32(%arg0: i32, %arg1: i32, %arg2: memref<128x128xf32, #tpu.memory_space<vmem>>, %arg3: memref<128x128xf32, #tpu.memory_space<vmem>>, %arg4: memref<1x128xf32, #tpu.memory_space<vmem>>, %arg5: memref<128x128xf32, #tpu.memory_space<vmem>>) attributes {dimension_semantics = [#tpu.dimension_semantics<parallel>, #tpu.dimension_semantics<arbitrary>], iteration_bounds = array<i64: 3, 3>, scalar_prefetch = 0 : i64, scratch_operands = 0 : i64, tpu.core_type = #tpu.core_type<tc>, window_params = [{transform_indices = @transform_0, window_bounds = array<i64: 128, 128>}, {transform_indices = @transform_1, window_bounds = array<i64: 128, 128>}, {pipeline_mode = #tpu.pipeline_mode<synchronous>, transform_indices = @transform_2, window_bounds = array<i64: 1, 128>}, {transform_indices = @transform_3, window_bounds = array<i64: 128, 128>}]} {
    %c0_i32 = arith.constant 0 : i32
    %0 = arith.cmpi eq, %arg1, %c0_i32 : i32
    %1 = arith.extui %0 : i1 to i32
    %c0_i32_0 = arith.constant 0 : i32
    %2 = arith.cmpi ne, %1, %c0_i32_0 : i32
    scf.if %2 {
      %c0_8 = arith.constant 0 : index
      %c0_9 = arith.constant 0 : index
      %9 = vector.load %arg4[%c0_8, %c0_9] : memref<1x128xf32, #tpu.memory_space<vmem>>, vector<1x128xf32>
      %10 = vector.shape_cast %9 : vector<1x128xf32> to vector<1x128xf32>
      %11 = vector.broadcast %10 : vector<1x128xf32> to vector<128x128xf32>
      %c0_10 = arith.constant 0 : index
      %c0_11 = arith.constant 0 : index
      %12 = vector.load %arg5[%c0_10, %c0_11] : memref<128x128xf32, #tpu.memory_space<vmem>>, vector<128x128xf32>
      tpu.vector_store %arg5[%c0_10, %c0_11], %11 {strides = array<i32>} : memref<128x128xf32, #tpu.memory_space<vmem>>, vector<128x128xf32>,
    } else {
    }
    %c0 = arith.constant 0 : index
    %c0_1 = arith.constant 0 : index
    %3 = vector.load %arg5[%c0, %c0_1] : memref<128x128xf32, #tpu.memory_space<vmem>>, vector<128x128xf32>
    %c0_2 = arith.constant 0 : index
    %c0_3 = arith.constant 0 : index
    %4 = vector.load %arg2[%c0_2, %c0_3] : memref<128x128xf32, #tpu.memory_space<vmem>>, vector<128x128xf32>
    %c0_4 = arith.constant 0 : index
    %c0_5 = arith.constant 0 : index
    %5 = vector.load %arg3[%c0_4, %c0_5] : memref<128x128xf32, #tpu.memory_space<vmem>>, vector<128x128xf32>
    %cst = arith.constant dense<0.000000e+00> : vector<128x128xf32>
    %6 = tpu.matmul %4, %5, %cst {dimension_numbers = #tpu.dot_dimension_numbers<[1], [0], [0], [1], [0, 0, 1, 1], [], []>} : vector<128x128xf32>, vector<128x128xf32>, vector<128x128xf32> -> vector<128x128xf32>
    %7 = arith.addf %3, %6 : vector<128x128xf32>
    %c0_6 = arith.constant 0 : index
    %c0_7 = arith.constant 0 : index
    %8 = vector.load %arg5[%c0_6, %c0_7] : memref<128x128xf32, #tpu.memory_space<vmem>>, vector<128x128xf32>
    tpu.vector_store %arg5[%c0_6, %c0_7], %7 {strides = array<i32>} : memref<128x128xf32, #tpu.memory_space<vmem>>, vector<128x128xf32>,
    return
  }
  func.func @transform_0(%arg0: i32, %arg1: i32) -> (i32, i32) {
    %c0_i32 = arith.constant 0 : i32
    return %arg0, %arg1 : i32, i32
  }
  func.func @transform_1(%arg0: i32, %arg1: i32) -> (i32, i32) {
    %c0_i32 = arith.constant 0 : i32
    %c0_i32_0 = arith.constant 0 : i32
    return %arg1, %c0_i32 : i32, i32
  }
  func.func @transform_2(%arg0: i32, %arg1: i32) -> (i32, i32) {
    %c0_i32 = arith.constant 0 : i32
    %c0_i32_0 = arith.constant 0 : i32
    %c0_i32_1 = arith.constant 0 : i32
    return %c0_i32, %c0_i32_0 : i32, i32
  }
  func.func @transform_3(%arg0: i32, %arg1: i32) -> (i32, i32) {
    %c0_i32 = arith.constant 0 : i32
    %c0_i32_0 = arith.constant 0 : i32
    return %arg0, %c0_i32 : i32, i32
  }
}

</mosaic_0001>

<llo_original>
// kernel: tpu_custom_call.1
$region0: #{tpu_custom_call.1}
  #allocation0 [shape = 'u32[]', space=smem, size = 0x4, offset = 0x4, fixed_abs, tag = 'smem constant byte address 0x4 - core index']
  #allocation1 [shape = 'u32[72,128]{1,0:T(1,128)}', space=vmem, size = 0x9000, scoped, tag = 'internal scratch']
  %s0 = inlined_call_operand.hbm [shape: f32[384,384], index: 0, kind: input, shape index: {}]
  %s1 = inlined_call_operand.hbm [shape: f32[384,128], index: 1, kind: input, shape index: {}]
  %s2 = inlined_call_operand.vmem [shape: f32[1,128], index: 2, kind: input, shape index: {}]
  %s3 = inlined_call_operand.hbm [shape: f32[384,128], index: 3, kind: output, shape index: {}]
  %s4 = sld [smem:[#allocation0]]
  $region57: #{tpu_custom_call.1} parent=0
    _
  %s6 = ssub.s32 1, %s4
  %s7 = scalar_select 0, %s6, %s4
  $region1: #{tpu_custom_call.1} parent=0
    #allocation2 [shape = 'u8[131072]{0}', space=vmem, size = 0x20000, scoped, tag = 'input window, operand 0']
    #allocation3 [shape = 's32[2]{0}', space=sflag, size = 0x8, scoped, tag = 'scoped memory for tpu_custom_call.1']
    #allocation4 [shape = 's32[2]{0}', space=sflag, size = 0x8, scoped, tag = 'scoped memory for tpu_custom_call.1']
    #allocation5 [shape = 'u8[131072]{0}', space=vmem, size = 0x20000, scoped, tag = 'input window, operand 1']
    #allocation6 [shape = 's32[2]{0}', space=sflag, size = 0x8, scoped, tag = 'scoped memory for tpu_custom_call.1']
    #allocation7 [shape = 'u8[131072]{0}', space=vmem, size = 0x20000, scoped, tag = 'output window, operand 0']
    %8 = vsyncpa [#allocation3], 0
    %s9 = scalar_lea.sflag [#allocation3], 1
    %10 = vsyncpa %s9, 0
    %11 = vsyncpa [#allocation6], 0
    %s12 = scalar_lea.sflag [#allocation6], 1
    %13 = vsyncpa %s12, 0
    %14 = vsyncpa [#allocation4], 0
    %s15 = scalar_lea.sflag [#allocation4], 1
    %16 = vsyncpa %s15, 0
    loop: start=0, step=1, limit=11
    $region2: #{tpu_custom_call.1} parent=1 // loop_pre_header
      _
    $region3: #{tpu_custom_call.1} parent=1 // loop_header
      %s18 = sphi 0, %s22
      %p19 = scmp.ge.s32.totalorder %s18, 11
      %s25 = sphi 0, %s37
      %s26 = sphi 0, %s33
      %s27 = sphi 0, %s25
      %s28 = sphi 0, %s26
      %s29 = sphi 0, %s27
      %s30 = sphi 0, %s28
      %s42 = sphi 0, %s44
      %s45 = sphi 0, %s42
      %s46 = sphi 0, %s45
      %s62 = sphi 0, %s46
      %s68 = sphi 0, %s70
      %s71 = sphi 0, %s68
      %s72 = sphi 0, %s71
      %s88 = sphi 0, %s72
      %s92 = sphi 0, %s92
      %s94 = sphi 0, %s92
      %s95 = sphi 0, %s94
      %s109 = sphi 0, %s95
      %s115 = sphi 0, %s117
      %s118 = sphi 0, %s115
      %s119 = sphi 0, %s118
      %s135 = sphi 0, %s119
    $region4: #{tpu_custom_call.1} parent=1 // loop_header_branch
      %21 = sbr.rel (%p19) target = $region8
    $region5: #{tpu_custom_call.1} parent=1 // loop_body
      %s23 = ssub.s32 %s18, 1
      %s24 = ssub.s32 %s18, 2
      %s31 = sadd.s32 1, %s26
      %p32 = scmp.ge.s32.totalorder %s31, 3
      %s33 = scalar_select %p32, 0, %s31
      %s34 = sadd.s32 1, %s25
      %s35 = scalar_select %p32, %s34, %s25
      %p36 = scmp.ge.s32.totalorder %s35, 3
      %s37 = scalar_select %p36, 0, %s35
      %s38 = ssub.s32 %s25, %s37
      %s39 = ssub.s32 %s26, %s33
      %s40 = sor.u32 %s38, %s39
      %p41 = scmp.eq.s32.totalorder %s40, 0
      %s43 = sadd.s32 %s42, 1
      %s44 = scalar_select %p41, %s42, %s43
      %p47 = pneg %p41
      %p48 = scmp.eq.s32.totalorder %s18, 8
      %p49 = por %p47, %p48
      %p50 = scmp.ne.s32.totalorder %s42, %s45
      %p51 = scmp.eq.s32.totalorder %s18, 0
      %p52 = por %p50, %p51
      %p53 = scmp.ne.s32.totalorder %s42, %s45
      %p54 = scmp.eq.s32.totalorder %s23, 8
      %p55 = por %p53, %p54
      %p56 = scmp.ne.s32.totalorder %s45, %s46
      %p57 = scmp.eq.s32.totalorder %s23, 0
      %p58 = por %p56, %p57
      %p59 = scmp.ne.s32.totalorder %s45, %s46
      %p60 = scmp.eq.s32.totalorder %s24, 8
      %p61 = por %p59, %p60
      %p63 = scmp.ne.s32.totalorder %s46, %s62
      %p64 = scmp.eq.s32.totalorder %s24, 0
      %p65 = por %p63, %p64
      %s66 = ssub.s32 %s26, %s33
      %p67 = scmp.eq.s32.totalorder %s66, 0
      %s69 = sadd.s32 %s68, 1
      %s70 = scalar_select %p67, %s68, %s69
      %p73 = pneg %p67
      %p74 = scmp.eq.s32.totalorder %s18, 8
      %p75 = por %p73, %p74
      %p76 = scmp.ne.s32.totalorder %s68, %s71
      %p77 = scmp.eq.s32.totalorder %s18, 0
      %p78 = por %p76, %p77
      %p79 = scmp.ne.s32.totalorder %s68, %s71
      %p80 = scmp.eq.s32.totalorder %s23, 8
      %p81 = por %p79, %p80
      %p82 = scmp.ne.s32.totalorder %s71, %s72
      %p83 = scmp.eq.s32.totalorder %s23, 0
      %p84 = por %p82, %p83
      %p85 = scmp.ne.s32.totalorder %s71, %s72
      %p86 = scmp.eq.s32.totalorder %s24, 8
      %p87 = por %p85, %p86
      %p89 = scmp.ne.s32.totalorder %s72, %s88
      %p90 = scmp.eq.s32.totalorder %s24, 0
      %p91 = por %p89, %p90
      %s93 = sadd.s32 %s92, 1
      %p96 = scmp.eq.s32.totalorder %s18, 8
      %p97 = scmp.ne.s32.totalorder %s92, %s94
      %p98 = scmp.eq.s32.totalorder %s18, 0
      %p99 = por %p97, %p98
      %p100 = scmp.ne.s32.totalorder %s92, %s94
      %p101 = scmp.eq.s32.totalorder %s23, 8
      %p102 = por %p100, %p101
      %p103 = scmp.ne.s32.totalorder %s94, %s95
      %p104 = scmp.eq.s32.totalorder %s23, 0
      %p105 = por %p103, %p104
      %p106 = scmp.ne.s32.totalorder %s94, %s95
      %p107 = scmp.eq.s32.totalorder %s24, 8
      %p108 = por %p106, %p107
      %p110 = scmp.ne.s32.totalorder %s95, %s109
      %p111 = scmp.eq.s32.totalorder %s24, 0
      %p112 = por %p110, %p111
      %s113 = ssub.s32 %s25, %s37
      %p114 = scmp.eq.s32.totalorder %s113, 0
      %s116 = sadd.s32 %s115, 1
      %s117 = scalar_select %p114, %s115, %s116
      %p120 = pneg %p114
      %p121 = scmp.eq.s32.totalorder %s18, 8
      %p122 = por %p120, %p121
      %p123 = scmp.ne.s32.totalorder %s115, %s118
      %p124 = scmp.eq.s32.totalorder %s18, 0
      %p125 = por %p123, %p124
      %p126 = scmp.ne.s32.totalorder %s115, %s118
      %p127 = scmp.eq.s32.totalorder %s23, 8
      %p128 = por %p126, %p127
      %p129 = scmp.ne.s32.totalorder %s118, %s119
      %p130 = scmp.eq.s32.totalorder %s23, 0
      %p131 = por %p129, %p130
      %p132 = scmp.ne.s32.totalorder %s118, %s119
      %p133 = scmp.eq.s32.totalorder %s24, 8
      %p134 = por %p132, %p133
      %p136 = scmp.ne.s32.totalorder %s119, %s135
      %p137 = scmp.eq.s32.totalorder %s24, 0
      %p138 = por %p136, %p137
      %p139 = scmp.le.s32.totalorder 1, %s18
      %p140 = scmp.lt.s32.totalorder %s18, 10
      %p141 = pnand %p139, %p140
      %p142 = pneg %p141
      // Predicated region
      $region9: #{tpu_custom_call.1} parent=5 // pred_check
        _
      $region10: #{tpu_custom_call.1} parent=5 // pred_check_branch
        %144 = sbr.rel (%p141) target = $region12
      $region11: #{tpu_custom_call.1} parent=5 // pred_region
        %s145 = ssub.s32 %s18, 1
        // Predicated region
        $region13: #{tpu_custom_call.1} parent=11 // pred_check
          %p146 = pneg %p105
        $region14: #{tpu_custom_call.1} parent=11 // pred_check_branch
          %148 = sbr.rel (%p146) target = $region16
        $region15: #{tpu_custom_call.1} parent=11 // pred_region
          _
        $region16: #{tpu_custom_call.1} parent=11 // pred_fallthru
          _
      $region12: #{tpu_custom_call.1} parent=5 // pred_fallthru
        _
      %p149 = scmp.lt.s32.totalorder %s18, 9
      // Predicated region
      $region17: #{tpu_custom_call.1} parent=5 // pred_check
        %p150 = pneg %p149
      $region18: #{tpu_custom_call.1} parent=5 // pred_check_branch
        %152 = sbr.rel (%p150) target = $region20
      $region19: #{tpu_custom_call.1} parent=5 // pred_region
        // Predicated region
        $region21: #{tpu_custom_call.1} parent=19 // pred_check
          %p153 = pneg %p52
        $region22: #{tpu_custom_call.1} parent=19 // pred_check_branch
          %155 = sbr.rel (%p153) target = $region24
        $region23: #{tpu_custom_call.1} parent=19 // pred_region
          %s156 = sand.u32 %s42, 1
          %s157 = scalar_lea.sflag [#allocation3], %s156
          %s158 = sand.u32 %s42, 1
          %s159 = smul.addr %s158, 128
          %s160 = scalar_lea.vmem [#allocation2], %s159
          %s161 = smul.u32 16, %s25
          %163 = vsyncadd %s157, 0
          %s164 = smul.addr %s161, 3
          %s165 = sadd.s32 %s26, %s164
          %s166 = smul.addr %s165, 8
          %s167 = scalar_lea.hbm %s0, %s166
          %s168 = sshll.u32 %s167, 4
          %s169 = int_to_ptr.hbm [resolvable:$true] %s168
          %s170 = sshll.u32 %s160, 4
          %s171 = int_to_ptr.vmem [resolvable:$true] %s170
          %176 = dma.hbm_to_vmem [thread:$0]  %s169, 2048, %s171, %s157, 384, 128, 8
        $region24: #{tpu_custom_call.1} parent=19 // pred_fallthru
          _
        // Predicated region
        $region25: #{tpu_custom_call.1} parent=19 // pred_check
          %p177 = pneg %p78
        $region26: #{tpu_custom_call.1} parent=19 // pred_check_branch
          %179 = sbr.rel (%p177) target = $region28
        $region27: #{tpu_custom_call.1} parent=19 // pred_region
          %s180 = sand.u32 %s68, 1
          %s181 = scalar_lea.sflag [#allocation6], %s180
          %s182 = sand.u32 %s68, 1
          %s183 = smul.addr %s182, 128
          %s184 = scalar_lea.vmem [#allocation5], %s183
          %s185 = smul.u32 16, %s26
          %187 = vsyncadd %s181, 0
          %s188 = smul.addr %s185, 8
          %s189 = scalar_lea.hbm %s1, %s188
          %s190 = sshll.u32 %s189, 4
          %s191 = int_to_ptr.hbm [resolvable:$true] %s190
          %s192 = sshll.u32 %s184, 4
          %s193 = int_to_ptr.vmem [resolvable:$true] %s192
          %198 = dma.hbm_to_vmem [thread:$0]  %s191, 2048, %s193, %s181, 128, 128, 8
        $region28: #{tpu_custom_call.1} parent=19 // pred_fallthru
          _
      $region20: #{tpu_custom_call.1} parent=5 // pred_fallthru
        _
      %p199 = scmp.le.s32.totalorder 1, %s18
      %p200 = scmp.lt.s32.totalorder %s18, 10
      %p201 = pnand %p199, %p200
      %p202 = pneg %p201
      // Predicated region
      $region29: #{tpu_custom_call.1} parent=5 // pred_check
        _
      $region30: #{tpu_custom_call.1} parent=5 // pred_check_branch
        %204 = sbr.rel (%p201) target = $region32
      $region31: #{tpu_custom_call.1} parent=5 // pred_region
        %s205 = ssub.s32 %s18, 1
        %s206 = sand.u32 %s45, 1
        %s207 = scalar_lea.sflag [#allocation3], %s206
        %s208 = sand.u32 %s45, 1
        %s209 = smul.addr %s208, 128
        %s210 = scalar_lea.vmem [#allocation2], %s209
        // Predicated region
        $region33: #{tpu_custom_call.1} parent=31 // pred_check
          %p211 = pneg %p58
        $region34: #{tpu_custom_call.1} parent=31 // pred_check_branch
          %213 = sbr.rel (%p211) target = $region36
        $region35: #{tpu_custom_call.1} parent=31 // pred_region
          %215 = dma.done %s207, 2048
        $region36: #{tpu_custom_call.1} parent=31 // pred_fallthru
          _
        %s216 = sand.u32 %s71, 1
        %s217 = scalar_lea.sflag [#allocation6], %s216
        %s218 = sand.u32 %s71, 1
        %s219 = smul.addr %s218, 128
        %s220 = scalar_lea.vmem [#allocation5], %s219
        // Predicated region
        $region37: #{tpu_custom_call.1} parent=31 // pred_check
          %p221 = pneg %p84
        $region38: #{tpu_custom_call.1} parent=31 // pred_check_branch
          %223 = sbr.rel (%p221) target = $region40
        $region39: #{tpu_custom_call.1} parent=31 // pred_region
          %225 = dma.done %s217, 2048
        $region40: #{tpu_custom_call.1} parent=31 // pred_fallthru
          _
        %s226 = sand.u32 %s45, 1
        %s227 = scalar_lea.sflag [#allocation3], %s226
        %s228 = sand.u32 %s45, 1
        %s229 = smul.addr %s228, 128
        %s230 = scalar_lea.vmem [#allocation2], %s229
        %p231 = pneg %p58
        %p232 = pneg %p55
        %s233 = sand.u32 %s71, 1
        %s234 = scalar_lea.sflag [#allocation6], %s233
        %s235 = sand.u32 %s71, 1
        %s236 = smul.addr %s235, 128
        %s237 = scalar_lea.vmem [#allocation5], %s236
        %p238 = pneg %p84
        %p239 = pneg %p81
        %p240 = pneg %p105
        %p241 = pneg %p102
        %p242 = pneg %p131
        %p243 = pneg %p128
        %s244 = sand.u32 %s118, 1
        %s245 = scalar_lea.sflag [#allocation4], %s244
        %s246 = sand.u32 %s118, 1
        %s247 = smul.addr %s246, 128
        %s248 = scalar_lea.vmem [#allocation7], %s247
        %s249 = smul.u32 16, %s27
        %s250 = smul.u32 16, %s28
        %s251 = smul.u32 16, %s27
        %p252 = scmp.eq.s32.totalorder %s28, 0
        // Predicated region
        $region41: #{tpu_custom_call.1} parent=31 // pred_check
          %p253 = pneg %p252
        $region42: #{tpu_custom_call.1} parent=31 // pred_check_branch
          %255 = sbr.rel (%p253) target = $region44
        $region43: #{tpu_custom_call.1} parent=31 // pred_region
          %v256 = vld [vmem:[%s2] sm:$0x1]
          %v258 = vperm.slane %v256, 0
          %260 = vst [vmem:[%s248] sm:$0xff] %v258
          %261 = vst [vmem:[%s248 + $0x8] sm:$0xff] %v258
          %262 = vst [vmem:[%s248 + $0x10] sm:$0xff] %v258
          %263 = vst [vmem:[%s248 + $0x18] sm:$0xff] %v258
          %264 = vst [vmem:[%s248 + $0x20] sm:$0xff] %v258
          %265 = vst [vmem:[%s248 + $0x28] sm:$0xff] %v258
          %266 = vst [vmem:[%s248 + $0x30] sm:$0xff] %v258
          %267 = vst [vmem:[%s248 + $0x38] sm:$0xff] %v258
          %268 = vst [vmem:[%s248 + $0x40] sm:$0xff] %v258
          %269 = vst [vmem:[%s248 + $0x48] sm:$0xff] %v258
          %270 = vst [vmem:[%s248 + $0x50] sm:$0xff] %v258
          %271 = vst [vmem:[%s248 + $0x58] sm:$0xff] %v258
          %272 = vst [vmem:[%s248 + $0x60] sm:$0xff] %v258
          %273 = vst [vmem:[%s248 + $0x68] sm:$0xff] %v258
          %274 = vst [vmem:[%s248 + $0x70] sm:$0xff] %v258
          %275 = vst [vmem:[%s248 + $0x78] sm:$0xff] %v258
        $region44: #{tpu_custom_call.1} parent=31 // pred_fallthru
          _
        %v276 = vld [vmem:[%s248] sm:$0xff]
        %v277 = vld [vmem:[%s248 + $0x8] sm:$0xff]
        %v278 = vld [vmem:[%s248 + $0x10] sm:$0xff]
        %v279 = vld [vmem:[%s248 + $0x18] sm:$0xff]
        %v280 = vld [vmem:[%s248 + $0x20] sm:$0xff]
        %v281 = vld [vmem:[%s248 + $0x28] sm:$0xff]
        %v282 = vld [vmem:[%s248 + $0x30] sm:$0xff]
        %v283 = vld [vmem:[%s248 + $0x38] sm:$0xff]
        %v284 = vld [vmem:[%s248 + $0x40] sm:$0xff]
        %v285 = vld [vmem:[%s248 + $0x48] sm:$0xff]
        %v286 = vld [vmem:[%s248 + $0x50] sm:$0xff]
        %v287 = vld [vmem:[%s248 + $0x58] sm:$0xff]
        %v288 = vld [vmem:[%s248 + $0x60] sm:$0xff]
        %v289 = vld [vmem:[%s248 + $0x68] sm:$0xff]
        %v290 = vld [vmem:[%s248 + $0x70] sm:$0xff]
        %v291 = vld [vmem:[%s248 + $0x78] sm:$0xff]
        %v292 = vld [vmem:[%s210] sm:$0xff]
        %v293 = vld [vmem:[%s210 + $0x8] sm:$0xff]
        %v294 = vld [vmem:[%s210 + $0x10] sm:$0xff]
        %v295 = vld [vmem:[%s210 + $0x18] sm:$0xff]
        %v296 = vld [vmem:[%s210 + $0x20] sm:$0xff]
        %v297 = vld [vmem:[%s210 + $0x28] sm:$0xff]
        %v298 = vld [vmem:[%s210 + $0x30] sm:$0xff]
        %v299 = vld [vmem:[%s210 + $0x38] sm:$0xff]
        %v300 = vld [vmem:[%s210 + $0x40] sm:$0xff]
        %v301 = vld [vmem:[%s210 + $0x48] sm:$0xff]
        %v302 = vld [vmem:[%s210 + $0x50] sm:$0xff]
        %v303 = vld [vmem:[%s210 + $0x58] sm:$0xff]
        %v304 = vld [vmem:[%s210 + $0x60] sm:$0xff]
        %v305 = vld [vmem:[%s210 + $0x68] sm:$0xff]
        %v306 = vld [vmem:[%s210 + $0x70] sm:$0xff]
        %v307 = vld [vmem:[%s210 + $0x78] sm:$0xff]
        %v308 = vld [vmem:[%s220] sm:$0xff]
        %v309 = vld [vmem:[%s220 + $0x8] sm:$0xff]
        %v310 = vld [vmem:[%s220 + $0x10] sm:$0xff]
        %v311 = vld [vmem:[%s220 + $0x18] sm:$0xff]
        %v312 = vld [vmem:[%s220 + $0x20] sm:$0xff]
        %v313 = vld [vmem:[%s220 + $0x28] sm:$0xff]
        %v314 = vld [vmem:[%s220 + $0x30] sm:$0xff]
        %v315 = vld [vmem:[%s220 + $0x38] sm:$0xff]
        %v316 = vld [vmem:[%s220 + $0x40] sm:$0xff]
        %v317 = vld [vmem:[%s220 + $0x48] sm:$0xff]
        %v318 = vld [vmem:[%s220 + $0x50] sm:$0xff]
        %v319 = vld [vmem:[%s220 + $0x58] sm:$0xff]
        %v320 = vld [vmem:[%s220 + $0x60] sm:$0xff]
        %v321 = vld [vmem:[%s220 + $0x68] sm:$0xff]
        %v322 = vld [vmem:[%s220 + $0x70] sm:$0xff]
        %v323 = vld [vmem:[%s220 + $0x78] sm:$0xff]
        %324 = vmatpush.msra.mxu0 %v323
        %325 = vmatpush.msra.mxu0 %v322
        %326 = vmatpush.msra.mxu0 %v321
        %327 = vmatpush.msra.mxu0 %v320
        %328 = vmatpush.msra.mxu0 %v319
        %329 = vmatpush.msra.mxu0 %v318
        %330 = vmatpush.msra.mxu0 %v317
        %331 = vmatpush.msra.mxu0 %v316
        %332 = vmatpush.msra.mxu0 %v315
        %333 = vmatpush.msra.mxu0 %v314
        %334 = vmatpush.msra.mxu0 %v313
        %335 = vmatpush.msra.mxu0 %v312
        %336 = vmatpush.msra.mxu0 %v311
        %337 = vmatpush.msra.mxu0 %v310
        %338 = vmatpush.msra.mxu0 %v309
        %339 = vmatpush.msra.mxu0 %v308
        %340 = vmatmul.f32.gmra.mxu0 %v292
        %v341 = vpop.f32.mrf.mxu0
        %v342 = vadd.f32 0.0, %v341
        %343 = vmatmul.f32.gmra.mxu0 %v293
        %v344 = vpop.f32.mrf.mxu0
        %v345 = vadd.f32 0.0, %v344
        %346 = vmatmul.f32.gmra.mxu0 %v294
        %v347 = vpop.f32.mrf.mxu0
        %v348 = vadd.f32 0.0, %v347
        %349 = vmatmul.f32.gmra.mxu0 %v295
        %v350 = vpop.f32.mrf.mxu0
        %v351 = vadd.f32 0.0, %v350
        %352 = vmatmul.f32.gmra.mxu0 %v296
        %v353 = vpop.f32.mrf.mxu0
        %v354 = vadd.f32 0.0, %v353
        %355 = vmatmul.f32.gmra.mxu0 %v297
        %v356 = vpop.f32.mrf.mxu0
        %v357 = vadd.f32 0.0, %v356
        %358 = vmatmul.f32.gmra.mxu0 %v298
        %v359 = vpop.f32.mrf.mxu0
        %v360 = vadd.f32 0.0, %v359
        %361 = vmatmul.f32.gmra.mxu0 %v299
        %v362 = vpop.f32.mrf.mxu0
        %v363 = vadd.f32 0.0, %v362
        %364 = vmatmul.f32.gmra.mxu0 %v300
        %v365 = vpop.f32.mrf.mxu0
        %v366 = vadd.f32 0.0, %v365
        %367 = vmatmul.f32.gmra.mxu0 %v301
        %v368 = vpop.f32.mrf.mxu0
        %v369 = vadd.f32 0.0, %v368
        %370 = vmatmul.f32.gmra.mxu0 %v302
        %v371 = vpop.f32.mrf.mxu0
        %v372 = vadd.f32 0.0, %v371
        %373 = vmatmul.f32.gmra.mxu0 %v303
        %v374 = vpop.f32.mrf.mxu0
        %v375 = vadd.f32 0.0, %v374
        %376 = vmatmul.f32.gmra.mxu0 %v304
        %v377 = vpop.f32.mrf.mxu0
        %v378 = vadd.f32 0.0, %v377
        %379 = vmatmul.f32.gmra.mxu0 %v305
        %v380 = vpop.f32.mrf.mxu0
        %v381 = vadd.f32 0.0, %v380
        %382 = vmatmul.f32.gmra.mxu0 %v306
        %v383 = vpop.f32.mrf.mxu0
        %v384 = vadd.f32 0.0, %v383
        %385 = vmatmul.f32.gmra.mxu0 %v307
        %v386 = vpop.f32.mrf.mxu0
        %v387 = vadd.f32 0.0, %v386
        %388 = vdwg.mxu0
        %v389 = vadd.f32 %v276, %v342
        %v390 = vadd.f32 %v277, %v345
        %v391 = vadd.f32 %v278, %v348
        %v392 = vadd.f32 %v279, %v351
        %v393 = vadd.f32 %v280, %v354
        %v394 = vadd.f32 %v281, %v357
        %v395 = vadd.f32 %v282, %v360
        %v396 = vadd.f32 %v283, %v363
        %v397 = vadd.f32 %v284, %v366
        %v398 = vadd.f32 %v285, %v369
        %v399 = vadd.f32 %v286, %v372
        %v400 = vadd.f32 %v287, %v375
        %v401 = vadd.f32 %v288, %v378
        %v402 = vadd.f32 %v289, %v381
        %v403 = vadd.f32 %v290, %v384
        %v404 = vadd.f32 %v291, %v387
        %405 = vst [vmem:[%s248] sm:$0xff] %v389
        %406 = vst [vmem:[%s248 + $0x8] sm:$0xff] %v390
        %407 = vst [vmem:[%s248 + $0x10] sm:$0xff] %v391
        %408 = vst [vmem:[%s248 + $0x18] sm:$0xff] %v392
        %409 = vst [vmem:[%s248 + $0x20] sm:$0xff] %v393
        %410 = vst [vmem:[%s248 + $0x28] sm:$0xff] %v394
        %411 = vst [vmem:[%s248 + $0x30] sm:$0xff] %v395
        %412 = vst [vmem:[%s248 + $0x38] sm:$0xff] %v396
        %413 = vst [vmem:[%s248 + $0x40] sm:$0xff] %v397
        %414 = vst [vmem:[%s248 + $0x48] sm:$0xff] %v398
        %415 = vst [vmem:[%s248 + $0x50] sm:$0xff] %v399
        %416 = vst [vmem:[%s248 + $0x58] sm:$0xff] %v400
        %417 = vst [vmem:[%s248 + $0x60] sm:$0xff] %v401
        %418 = vst [vmem:[%s248 + $0x68] sm:$0xff] %v402
        %419 = vst [vmem:[%s248 + $0x70] sm:$0xff] %v403
        %420 = vst [vmem:[%s248 + $0x78] sm:$0xff] %v404
        %s421 = sand.u32 %s118, 1
        %s422 = scalar_lea.sflag [#allocation4], %s421
        %s423 = sand.u32 %s118, 1
        %s424 = smul.addr %s423, 128
        %s425 = scalar_lea.vmem [#allocation7], %s424
        // Predicated region
        $region45: #{tpu_custom_call.1} parent=31 // pred_check
          %p426 = pneg %p128
        $region46: #{tpu_custom_call.1} parent=31 // pred_check_branch
          %428 = sbr.rel (%p426) target = $region48
        $region47: #{tpu_custom_call.1} parent=31 // pred_region
          %s429 = smul.u32 16, %s27
          %431 = vsyncadd %s422, 0
          %s432 = smul.addr %s429, 8
          %s433 = scalar_lea.hbm %s3, %s432
          %s434 = sshll.u32 %s425, 4
          %s435 = int_to_ptr.vmem [resolvable:$true] %s434
          %s436 = sshll.u32 %s433, 4
          %s437 = int_to_ptr.hbm [resolvable:$true] %s436
          %442 = dma.vmem_to_hbm [thread:$0]  %s435, 2048, %s437, %s422, 128, 128, 8
        $region48: #{tpu_custom_call.1} parent=31 // pred_fallthru
          _
      $region32: #{tpu_custom_call.1} parent=5 // pred_fallthru
        _
      %p443 = scmp.le.s32.totalorder 2, %s18
      // Predicated region
      $region49: #{tpu_custom_call.1} parent=5 // pred_check
        %p444 = pneg %p443
      $region50: #{tpu_custom_call.1} parent=5 // pred_check_branch
        %446 = sbr.rel (%p444) target = $region52
      $region51: #{tpu_custom_call.1} parent=5 // pred_region
        %s447 = ssub.s32 %s18, 2
        // Predicated region
        $region53: #{tpu_custom_call.1} parent=51 // pred_check
          %p448 = pneg %p134
        $region54: #{tpu_custom_call.1} parent=51 // pred_check_branch
          %450 = sbr.rel (%p448) target = $region56
        $region55: #{tpu_custom_call.1} parent=51 // pred_region
          %s451 = sand.u32 %s119, 1
          %s452 = scalar_lea.sflag [#allocation4], %s451
          %s453 = sand.u32 %s119, 1
          %s454 = smul.addr %s453, 128
          %s455 = scalar_lea.vmem [#allocation7], %s454
          %457 = dma.done %s452, 2048
        $region56: #{tpu_custom_call.1} parent=51 // pred_fallthru
          _
      $region52: #{tpu_custom_call.1} parent=5 // pred_fallthru
        _
    $region6: #{tpu_custom_call.1} parent=1 // loop_footer
      %s22 = sadd.s32 1, %s18
    $region7: #{tpu_custom_call.1} parent=1 // loop_footer_branch
      %17 = sbr.rel target = $region3
    $region8: #{tpu_custom_call.1} parent=1 // loop_exit
      _
    %458 = vsyncpa [#allocation3], 1
    %s459 = scalar_lea.sflag [#allocation3], 1
    %460 = vsyncpa %s459, 1
    %461 = vsyncpa [#allocation6], 1
    %s462 = scalar_lea.sflag [#allocation6], 1
    %463 = vsyncpa %s462, 1
    %464 = vsyncpa [#allocation4], 1
    %s465 = scalar_lea.sflag [#allocation4], 1
    %466 = vsyncpa %s465, 1

</llo_original>
